<compile_context>
chip_gen: v5e
topology: v5e:2x2
jax: 0.10.0
libtpu: 0.0.40
codegen_flags: <defaults>
</compile_context>

<pallas_src>
import jax
import jax.numpy as jnp
from jax.experimental import pallas as pl
from jax.experimental.pallas import tpu as pltpu


def _normalize_kernel(x_ref, neg_mean_ref, inv_std_ref, o_ref):
    # x_ref, o_ref:            (ROWS_BLK, L) VMEM tiles (lane-dense last dim).
    # neg_mean_ref, inv_std_ref: (ROWS_BLK, 1) VMEM tiles, broadcast over lanes.
    o_ref[...] = (x_ref[...] + neg_mean_ref[...]) * inv_std_ref[...]


def normalization_forward(img, mean, std, *, target_tile_bytes=1 << 20):
    """img: (N, C, H, W); mean, std: (C,). Returns (img - mean)/std per channel."""
    N, C, H, W = img.shape
    R = N * C
    L = H * W
    dtype = img.dtype
    itemsize = jnp.dtype(dtype).itemsize

    # Lane-dense 2D view: rows = (n, c) pairs, cols = flattened spatial.
    x2d = img.reshape(R, L)

    # Per-row constants (length-C work, negligible): out = (x - mean) * (1/std).
    inv_std_c = (1.0 / std).astype(dtype)
    neg_mean_c = (-mean).astype(dtype)
    inv_std = jnp.tile(inv_std_c, N).reshape(R, 1)    # channel cycles fastest
    neg_mean = jnp.tile(neg_mean_c, N).reshape(R, 1)

    # Row block: aim for ~target_tile_bytes per input tile (0.5-1 MiB keeps the
    # double-buffered working set well inside scoped VMEM on v5e/v6e/v7x).
    # Sublane dim must be a multiple of 8 or the full extent; the lane dim is
    # the full L extent, which is always legal.
    bytes_per_row = max(1, L * itemsize)
    rows_blk = max(1, target_tile_bytes // bytes_per_row)
    if rows_blk >= R:
        rows_blk = R                               # full extent is always legal
    else:
        rows_blk = max(8, (rows_blk // 8) * 8)     # multiple of 8 sublanes
        rows_blk = min(rows_blk, R)

    grid = (pl.cdiv(R, rows_blk),)

    out2d = pl.pallas_call(
        _normalize_kernel,
        out_shape=jax.ShapeDtypeStruct((R, L), dtype),
        grid=grid,
        in_specs=[
            pl.BlockSpec((rows_blk, L), lambda i: (i, 0)),   # x
            pl.BlockSpec((rows_blk, 1), lambda i: (i, 0)),   # -mean per row
            pl.BlockSpec((rows_blk, 1), lambda i: (i, 0)),   # 1/std per row
        ],
        out_specs=pl.BlockSpec((rows_blk, L), lambda i: (i, 0)),
        compiler_params=pltpu.CompilerParams(
            dimension_semantics=("parallel",),   # lets v7x shard across 2 TCs
        ),
        cost_estimate=pl.CostEstimate(
            flops=2 * R * L,
            transcendentals=0,
            bytes_accessed=2 * R * L * itemsize,
        ),
    )(x2d, neg_mean, inv_std)

    return out2d.reshape(N, C, H, W)


if __name__ == "__main__":
    key = jax.random.PRNGKey(0)
    N, C, H, W = 2, 4, 16, 16

    k_img, _ = jax.random.split(key)
    img = jax.random.normal(k_img, (N, C, H, W), dtype=jnp.float32)

    # Deterministic per-channel mean/std (ImageNet-style constants).
    mean = jnp.array([0.485, 0.456, 0.406, 0.5], dtype=jnp.float32)[:C]
    std = jnp.array([0.229, 0.224, 0.225, 0.25], dtype=jnp.float32)[:C]

    out = normalization_forward(img, mean, std)
    out = jax.block_until_ready(out)

    # Reference check in plain JAX (same broadcasting as mean.view(-1,1,1)).
    ref = (img - mean[:, None, None]) / std[:, None, None]
    # Kernel uses (x - m) * (1/s) instead of a divide -> ~1-2 ulp difference.
    assert jnp.allclose(out, ref, atol=1e-5, rtol=1e-5), "mismatch vs reference"

    print("KERNEL_OK")
</pallas_src>

<mosaic_0001>
module attributes {stable_mosaic.version = 11 : i64} {
  func.func @_normalize_kernel(%arg0: i32, %arg1: memref<8x256xf32, #tpu.memory_space<vmem>>, %arg2: memref<8x1xf32, #tpu.memory_space<vmem>>, %arg3: memref<8x1xf32, #tpu.memory_space<vmem>>, %arg4: memref<8x256xf32, #tpu.memory_space<vmem>>) attributes {dimension_semantics = [#tpu.dimension_semantics<parallel>], iteration_bounds = array<i64: 1>, scalar_prefetch = 0 : i64, scratch_operands = 0 : i64, tpu.core_type = #tpu.core_type<tc>, window_params = [{transform_indices = @transform_0, window_bounds = array<i64: 8, 256>}, {transform_indices = @transform_1, window_bounds = array<i64: 8, 1>}, {transform_indices = @transform_2, window_bounds = array<i64: 8, 1>}, {transform_indices = @transform_3, window_bounds = array<i64: 8, 256>}]} {
    %c0 = arith.constant 0 : index
    %c0_0 = arith.constant 0 : index
    %0 = vector.load %arg1[%c0, %c0_0] : memref<8x256xf32, #tpu.memory_space<vmem>>, vector<8x256xf32>
    %c0_1 = arith.constant 0 : index
    %c0_2 = arith.constant 0 : index
    %1 = vector.load %arg2[%c0_1, %c0_2] : memref<8x1xf32, #tpu.memory_space<vmem>>, vector<8x1xf32>
    %2 = vector.broadcast %1 : vector<8x1xf32> to vector<8x256xf32>
    %3 = arith.addf %0, %2 : vector<8x256xf32>
    %c0_3 = arith.constant 0 : index
    %c0_4 = arith.constant 0 : index
    %4 = vector.load %arg3[%c0_3, %c0_4] : memref<8x1xf32, #tpu.memory_space<vmem>>, vector<8x1xf32>
    %5 = vector.broadcast %4 : vector<8x1xf32> to vector<8x256xf32>
    %6 = arith.mulf %3, %5 : vector<8x256xf32>
    %c0_5 = arith.constant 0 : index
    %c0_6 = arith.constant 0 : index
    %7 = vector.load %arg4[%c0_5, %c0_6] : memref<8x256xf32, #tpu.memory_space<vmem>>, vector<8x256xf32>
    tpu.vector_store %arg4[%c0_5, %c0_6], %6 {strides = array<i32>} : memref<8x256xf32, #tpu.memory_space<vmem>>, vector<8x256xf32>,
    return
  }
  func.func @transform_0(%arg0: i32) -> (i32, i32) {
    %c0_i32 = arith.constant 0 : i32
    %c0_i32_0 = arith.constant 0 : i32
    return %arg0, %c0_i32 : i32, i32
  }
  func.func @transform_1(%arg0: i32) -> (i32, i32) {
    %c0_i32 = arith.constant 0 : i32
    %c0_i32_0 = arith.constant 0 : i32
    return %arg0, %c0_i32 : i32, i32
  }
  func.func @transform_2(%arg0: i32) -> (i32, i32) {
    %c0_i32 = arith.constant 0 : i32
    %c0_i32_0 = arith.constant 0 : i32
    return %arg0, %c0_i32 : i32, i32
  }
  func.func @transform_3(%arg0: i32) -> (i32, i32) {
    %c0_i32 = arith.constant 0 : i32
    %c0_i32_0 = arith.constant 0 : i32
    return %arg0, %c0_i32 : i32, i32
  }
}

</mosaic_0001>

<llo_original>
// kernel: tpu_custom_call.1
$region0: #{tpu_custom_call.1}
  #allocation0 [shape = 'u32[]', space=smem, size = 0x4, offset = 0x4, fixed_abs, tag = 'smem constant byte address 0x4 - core index']
  #allocation1 [shape = 'u32[72,128]{1,0:T(1,128)}', space=vmem, size = 0x9000, scoped, tag = 'internal scratch']
  %s0 = inlined_call_operand.vmem [shape: f32[8,256], index: 0, kind: input, shape index: {}]
  %s1 = inlined_call_operand.vmem [shape: f32[8,1], index: 1, kind: input, shape index: {}]
  %s2 = inlined_call_operand.vmem [shape: f32[8,1], index: 2, kind: input, shape index: {}]
  %s3 = inlined_call_operand.hbm [shape: f32[8,256], index: 3, kind: output, shape index: {}]
  %s4 = sld [smem:[#allocation0]]
  $region22: #{tpu_custom_call.1} parent=0
    _
  %s6 = ssub.s32 1, %s4
  %s7 = scalar_select 0, %s6, %s4
  $region1: #{tpu_custom_call.1} parent=0
    #allocation2 [shape = 'u8[8192]{0}', space=vmem, size = 0x2000, scoped, tag = 'output window, operand 0, single buffered']
    #allocation3 [shape = 's32[1]{0}', space=sflag, size = 0x4, scoped, tag = 'scoped memory for tpu_custom_call.1']
    %8 = vsyncpa [#allocation3], 0
    // Predicated region
    $region2: #{tpu_custom_call.1} parent=1 // pred_check
      _
    $region3: #{tpu_custom_call.1} parent=1 // pred_check_branch
      %10 = sbr.rel (0) target = $region5
    $region4: #{tpu_custom_call.1} parent=1 // pred_region
      _
    $region5: #{tpu_custom_call.1} parent=1 // pred_fallthru
      _
    // Predicated region
    $region6: #{tpu_custom_call.1} parent=1 // pred_check
      _
    $region7: #{tpu_custom_call.1} parent=1 // pred_check_branch
      %12 = sbr.rel (0) target = $region9
    $region8: #{tpu_custom_call.1} parent=1 // pred_region
      _
    $region9: #{tpu_custom_call.1} parent=1 // pred_fallthru
      _
    // Predicated region
    $region10: #{tpu_custom_call.1} parent=1 // pred_check
      _
    $region11: #{tpu_custom_call.1} parent=1 // pred_check_branch
      %14 = sbr.rel (0) target = $region13
    $region12: #{tpu_custom_call.1} parent=1 // pred_region
      _
    $region13: #{tpu_custom_call.1} parent=1 // pred_fallthru
      _
    %v15 = vld [vmem:[%s0] sm:$0xff]
    %v16 = vld [vmem:[%s0 + $0x8] sm:$0xff]
    %v17 = vld [vmem:[%s1] sm:$0xff]
    %19 = vset.pattern.permute.xlu0 0
    %20 = vperm.xlu0 %19, %v17
    %v21 = vpop.permute.xlu0 %20
    %v23 = vadd.f32 %v15, %v21
    %v24 = vadd.f32 %v16, %v21
    %v25 = vld [vmem:[%s2] sm:$0xff]
    %27 = vset.pattern.permute.xlu0 0
    %28 = vperm.xlu0 %27, %v25
    %v29 = vpop.permute.xlu0 %28
    %v31 = vmul.f32 %v23, %v29
    %v32 = vmul.f32 %v24, %v29
    %33 = vst [vmem:[#allocation2] sm:$0xff] %v31
    %34 = vst [vmem:[#allocation2 + $0x8] sm:$0xff] %v32
    // Predicated region
    $region14: #{tpu_custom_call.1} parent=1 // pred_check
      _
    $region15: #{tpu_custom_call.1} parent=1 // pred_check_branch
      %36 = sbr.rel (0) target = $region17
    $region16: #{tpu_custom_call.1} parent=1 // pred_region
      %38 = vsyncadd [#allocation3], 0
      %s40 = sshll.u32 [#allocation2], 4
      %s41 = int_to_ptr.vmem [resolvable:$true] %s40
      %s42 = sshll.u32 %s3, 4
      %s43 = int_to_ptr.hbm [resolvable:$true] %s42
      %45 = dma.vmem_to_hbm [thread:$0]  %s41, 256, %s43, [#allocation3]
    $region17: #{tpu_custom_call.1} parent=1 // pred_fallthru
      _
    // Predicated region
    $region18: #{tpu_custom_call.1} parent=1 // pred_check
      _
    $region19: #{tpu_custom_call.1} parent=1 // pred_check_branch
      %47 = sbr.rel (0) target = $region21
    $region20: #{tpu_custom_call.1} parent=1 // pred_region
      %49 = dma.done [#allocation3], 256
    $region21: #{tpu_custom_call.1} parent=1 // pred_fallthru
      _
    %50 = vsyncpa [#allocation3], 1

</llo_original>
